<compile_context>
chip_gen: v5e
topology: v5e:2x2
jax: 0.10.0
libtpu: 0.0.40
codegen_flags: <defaults>
</compile_context>

<pallas_src>
import math
import jax
import jax.numpy as jnp
from jax.experimental import pallas as pl
from jax.experimental.pallas import tpu as pltpu


_MAX_TILE = 512          # rows of the im2col matmul per grid step (multiple of 8)

_CPARAMS = pltpu.CompilerParams(
    dimension_semantics=("parallel", "parallel"),
    vmem_limit_bytes=40 * 1024 * 1024,
)


# ----------------------------- Pallas kernels ------------------------------

def _conv_bn_relu_kernel(p_ref, w_ref, shift_ref, o_ref):
    # p_ref: (1, TILE, 9*Cin) bf16   w_ref: (9*Cin, Cout) bf16 (BN scale folded)
    # shift_ref: (1, Cout) f32       o_ref: (1, TILE, Cout) bf16
    y = jnp.dot(p_ref[0], w_ref[...], preferred_element_type=jnp.float32)
    y = jnp.maximum(y + shift_ref[...], 0.0)
    o_ref[0] = y.astype(o_ref.dtype)


def _conv_bn_relu_pool_kernel(p_ref, w_ref, shift_ref, o_ref):
    # Conv + BN + ReLU followed by a fused 2x2 average pool: the four pooling
    # phases arrive as separate row-blocks and are averaged after ReLU.
    # p_ref: (1, 4, TILE, 9*Cin) bf16   o_ref: (1, TILE, Cout) bf16
    w = w_ref[...]
    s = shift_ref[...]
    acc = None
    for p in range(4):
        y = jnp.dot(p_ref[0, p], w, preferred_element_type=jnp.float32)
        y = jnp.maximum(y + s, 0.0)
        acc = y if acc is None else acc + y
    o_ref[0] = (acc * 0.25).astype(o_ref.dtype)


def _head_kernel(x_ref, w_ref, b_ref, o_ref):
    # x_ref: (1, T, F, C) bf16 (NHWC: time, freq, channels)
    # torch: mean over freq (dim=3), then max over time (dim=2), then fc.
    x = x_ref[0].astype(jnp.float32)                # (T, F, C)
    feat = jnp.mean(x, axis=1)                      # (T, C)   mean over freq
    feat = jnp.max(feat, axis=0, keepdims=True)     # (1, C)   max over time
    o_ref[0] = (jnp.dot(feat, w_ref[...], preferred_element_type=jnp.float32)
                + b_ref[...])


# ------------------------------ JAX glue -----------------------------------

def conv_bn_relu(x, w, shift, pool):
    """One conv3x3(pad=1) + folded-BN + ReLU (+ fused 2x2 avg pool).

    x: (B, H, W, Cin) bf16.  w: (9*Cin, Cout) bf16.  shift: (1, Cout) f32.
    Returns NHWC bf16.
    """
    B, H, W, Cin = x.shape
    Cout = w.shape[1]
    K = 9 * Cin

    xp = jnp.pad(x, ((0, 0), (1, 1), (1, 1), (0, 0)))
    cols = [xp[:, dh:dh + H, dw:dw + W, :] for dh in range(3) for dw in range(3)]
    pat = jnp.concatenate(cols, axis=-1)            # (B, H, W, 9*Cin)

    if pool:
        Ho, Wo = H // 2, W // 2                     # AvgPool2d(2) drops odd tail
        pat = pat[:, :2 * Ho, :2 * Wo, :]
        # Phase-major layout: (B, 4, Ho*Wo, K), p = dh_pool*2 + dw_pool.
        pat = pat.reshape(B, Ho, 2, Wo, 2, K).transpose(0, 2, 4, 1, 3, 5)
        pat = pat.reshape(B, 4, Ho * Wo, K)
        rows = Ho * Wo
        tile = rows if rows <= _MAX_TILE else _MAX_TILE
        out = pl.pallas_call(
            _conv_bn_relu_pool_kernel,
            out_shape=jax.ShapeDtypeStruct((B, rows, Cout), jnp.bfloat16),
            grid=(B, pl.cdiv(rows, tile)),
            in_specs=[
                pl.BlockSpec((1, 4, tile, K), lambda b, t: (b, 0, t, 0)),
                pl.BlockSpec((K, Cout), lambda b, t: (0, 0)),
                pl.BlockSpec((1, Cout), lambda b, t: (0, 0)),
            ],
            out_specs=pl.BlockSpec((1, tile, Cout), lambda b, t: (b, t, 0)),
            compiler_params=_CPARAMS,
        )(pat, w, shift)
        return out.reshape(B, Ho, Wo, Cout)
    else:
        rows = H * W
        pat = pat.reshape(B, rows, K)
        tile = rows if rows <= _MAX_TILE else _MAX_TILE
        out = pl.pallas_call(
            _conv_bn_relu_kernel,
            out_shape=jax.ShapeDtypeStruct((B, rows, Cout), jnp.bfloat16),
            grid=(B, pl.cdiv(rows, tile)),
            in_specs=[
                pl.BlockSpec((1, tile, K), lambda b, t: (b, t, 0)),
                pl.BlockSpec((K, Cout), lambda b, t: (0, 0)),
                pl.BlockSpec((1, Cout), lambda b, t: (0, 0)),
            ],
            out_specs=pl.BlockSpec((1, tile, Cout), lambda b, t: (b, t, 0)),
            compiler_params=_CPARAMS,
        )(pat, w, shift)
        return out.reshape(B, H, W, Cout)


# --------------------------- parameter init --------------------------------

def init_params(key, classes_num=10, in_channel=1):
    """Deterministic init matching the module's shapes.

    Conv: kaiming_uniform (leaky_relu, a=0) -> U(-sqrt(6/fan_in), +), no bias.
    BatchNorm (init_bn): weight=1, bias=0, running_mean=0, running_var=1;
    the BN scale is folded into the conv weight, the BN shift is kept as bias.
    fc: kaiming_uniform weight, bias=0.
    """
    # NOTE: loading real PyTorch conv weights (cout, cin, kh, kw) requires a
    # transpose to (kh, kw, cin, cout) before the reshape below.
    chans = [(in_channel, 64), (64, 64), (64, 128), (128, 128),
             (128, 256), (256, 256), (256, 512), (512, 512)]
    eps = 1e-5
    convs = []
    for cin, cout in chans:
        key, k = jax.random.split(key)
        fan_in = cin * 9
        bound = math.sqrt(6.0 / fan_in)
        w = jax.random.uniform(k, (3, 3, cin, cout), jnp.float32, -bound, bound)
        gamma = jnp.ones((cout,), jnp.float32)
        beta = jnp.zeros((cout,), jnp.float32)
        rmean = jnp.zeros((cout,), jnp.float32)
        rvar = jnp.ones((cout,), jnp.float32)
        scale = gamma / jnp.sqrt(rvar + eps)
        shift = (beta - rmean * scale).reshape(1, cout)
        w_folded = (w * scale).reshape(9 * cin, cout).astype(jnp.bfloat16)
        convs.append((w_folded, shift))

    key, k = jax.random.split(key)
    bound = math.sqrt(6.0 / 512)
    fc_w = jax.random.uniform(k, (512, classes_num), jnp.float32, -bound, bound)
    fc_b = jnp.zeros((1, classes_num), jnp.float32)
    return {"convs": convs, "fc": (fc_w, fc_b)}


# ------------------------------ forward ------------------------------------

def cnn9_avgpool_forward(x_nchw, params, permute=True):
    """x_nchw: (B, 1, freq_bins, time_steps) f32.  Returns (B, classes) f32."""
    # TODO(synk): BatchNorm is eval-mode only, using the init_bn running stats
    # folded into the weights; training-mode batch statistics not reproduced.
    x = jnp.transpose(x_nchw, (0, 1, 3, 2)) if permute else x_nchw   # (B,1,T,F)
    x = jnp.transpose(x, (0, 2, 3, 1)).astype(jnp.bfloat16)          # NHWC (B,T,F,1)

    # conv layers: (conv, conv+pool2x2) x3, then (conv, conv) [pool 1x1 == id]
    pool_flags = [False, True, False, True, False, True, False, False]
    for (w, shift), pool in zip(params["convs"], pool_flags):
        x = conv_bn_relu(x, w, shift, pool)

    fc_w, fc_b = params["fc"]
    B, T, F, C = x.shape
    classes = fc_w.shape[1]
    # TODO(synk): the head could be fused into the last conv kernel's epilogue
    # to save the final activation roundtrip; kept as a separate tiny kernel.
    out = pl.pallas_call(
        _head_kernel,
        out_shape=jax.ShapeDtypeStruct((B, 1, classes), jnp.float32),
        grid=(B,),
        in_specs=[
            pl.BlockSpec((1, T, F, C), lambda b: (b, 0, 0, 0)),
            pl.BlockSpec((C, classes), lambda b: (0, 0)),
            pl.BlockSpec((1, classes), lambda b: (0, 0)),
        ],
        out_specs=pl.BlockSpec((1, 1, classes), lambda b: (b, 0, 0)),
        compiler_params=pltpu.CompilerParams(dimension_semantics=("parallel",)),
    )(x, fc_w, fc_b)
    # The module's forward applies no output activation (logsoftmax attr unused).
    return out.reshape(B, classes)


if __name__ == "__main__":
    key = jax.random.PRNGKey(0)
    pkey, xkey = jax.random.split(key)
    params = init_params(pkey, classes_num=10, in_channel=1)
    # (batch, 1, freq_bins, time_steps)
    x = jax.random.normal(xkey, (2, 1, 16, 16), jnp.float32)
    out = cnn9_avgpool_forward(x, params, permute=True)
    out = jax.block_until_ready(out)
    assert out.shape == (2, 10) and out.dtype == jnp.float32
    assert bool(jnp.all(jnp.isfinite(out)))
    print("KERNEL_OK")
</pallas_src>

<mosaic_0001>
module attributes {stable_mosaic.version = 11 : i64} {
  func.func @_conv_bn_relu_kernel(%arg0: i32, %arg1: i32, %arg2: memref<1x256x9xbf16, #tpu.memory_space<vmem>>, %arg3: memref<9x64xbf16, #tpu.memory_space<vmem>>, %arg4: memref<1x64xf32, #tpu.memory_space<vmem>>, %arg5: memref<1x256x64xbf16, #tpu.memory_space<vmem>>) attributes {dimension_semantics = [#tpu.dimension_semantics<parallel>, #tpu.dimension_semantics<parallel>], iteration_bounds = array<i64: 2, 1>, scalar_prefetch = 0 : i64, scratch_operands = 0 : i64, tpu.core_type = #tpu.core_type<tc>, window_params = [{transform_indices = @transform_0, window_bounds = array<i64: 1, 256, 9>}, {pipeline_mode = #tpu.pipeline_mode<synchronous>, transform_indices = @transform_1, window_bounds = array<i64: 9, 64>}, {pipeline_mode = #tpu.pipeline_mode<synchronous>, transform_indices = @transform_2, window_bounds = array<i64: 1, 64>}, {transform_indices = @transform_3, window_bounds = array<i64: 1, 256, 64>}]} {
    %c0 = arith.constant 0 : index
    %c0_0 = arith.constant 0 : index
    %c0_1 = arith.constant 0 : index
    %0 = vector.load %arg2[%c0, %c0_0, %c0_1] : memref<1x256x9xbf16, #tpu.memory_space<vmem>>, vector<1x256x9xbf16>
    %1 = vector.shape_cast %0 : vector<1x256x9xbf16> to vector<256x9xbf16>
    %c0_2 = arith.constant 0 : index
    %c0_3 = arith.constant 0 : index
    %2 = vector.load %arg3[%c0_2, %c0_3] : memref<9x64xbf16, #tpu.memory_space<vmem>>, vector<9x64xbf16>
    %cst = arith.constant dense<0.000000e+00> : vector<256x64xf32>
    %3 = tpu.matmul %1, %2, %cst {dimension_numbers = #tpu.dot_dimension_numbers<[1], [0], [0], [1], [0, 0, 1, 1], [], []>} : vector<256x9xbf16>, vector<9x64xbf16>, vector<256x64xf32> -> vector<256x64xf32>
    %c0_4 = arith.constant 0 : index
    %c0_5 = arith.constant 0 : index
    %4 = vector.load %arg4[%c0_4, %c0_5] : memref<1x64xf32, #tpu.memory_space<vmem>>, vector<1x64xf32>
    %5 = vector.broadcast %4 : vector<1x64xf32> to vector<256x64xf32>
    %6 = arith.addf %3, %5 : vector<256x64xf32>
    %cst_6 = arith.constant 0.000000e+00 : f32
    %7 = vector.broadcast %cst_6 : f32 to vector<256x64xf32>
    %8 = arith.maximumf %6, %7 : vector<256x64xf32>
    %9 = arith.truncf %8 : vector<256x64xf32> to vector<256x64xbf16>
    %c0_7 = arith.constant 0 : index
    %c0_8 = arith.constant 0 : index
    %c0_9 = arith.constant 0 : index
    %10 = vector.load %arg5[%c0_7, %c0_8, %c0_9] : memref<1x256x64xbf16, #tpu.memory_space<vmem>>, vector<1x256x64xbf16>
    %11 = vector.shape_cast %10 : vector<1x256x64xbf16> to vector<256x64xbf16>
    %12 = vector.shape_cast %9 : vector<256x64xbf16> to vector<1x256x64xbf16>
    tpu.vector_store %arg5[%c0_7, %c0_8, %c0_9], %12 {strides = array<i32>} : memref<1x256x64xbf16, #tpu.memory_space<vmem>>, vector<1x256x64xbf16>,
    return
  }
  func.func @transform_0(%arg0: i32, %arg1: i32) -> (i32, i32, i32) {
    %c0_i32 = arith.constant 0 : i32
    %c0_i32_0 = arith.constant 0 : i32
    return %arg0, %arg1, %c0_i32 : i32, i32, i32
  }
  func.func @transform_1(%arg0: i32, %arg1: i32) -> (i32, i32) {
    %c0_i32 = arith.constant 0 : i32
    %c0_i32_0 = arith.constant 0 : i32
    %c0_i32_1 = arith.constant 0 : i32
    return %c0_i32, %c0_i32_0 : i32, i32
  }
  func.func @transform_2(%arg0: i32, %arg1: i32) -> (i32, i32) {
    %c0_i32 = arith.constant 0 : i32
    %c0_i32_0 = arith.constant 0 : i32
    %c0_i32_1 = arith.constant 0 : i32
    return %c0_i32, %c0_i32_0 : i32, i32
  }
  func.func @transform_3(%arg0: i32, %arg1: i32) -> (i32, i32, i32) {
    %c0_i32 = arith.constant 0 : i32
    %c0_i32_0 = arith.constant 0 : i32
    return %arg0, %arg1, %c0_i32 : i32, i32, i32
  }
}

</mosaic_0001>

<llo_original>
// kernel: tpu_custom_call.1
$region0: #{tpu_custom_call.1}
  #allocation0 [shape = 'u32[]', space=smem, size = 0x4, offset = 0x4, fixed_abs, tag = 'smem constant byte address 0x4 - core index']
  #allocation1 [shape = 'u32[72,128]{1,0:T(1,128)}', space=vmem, size = 0x9000, scoped, tag = 'internal scratch']
  %s0 = inlined_call_operand.vmem [shape: bf16[2,256,9], index: 0, kind: input, shape index: {}]
  %s1 = inlined_call_operand.vmem [shape: bf16[9,64], index: 1, kind: input, shape index: {}]
  %s2 = inlined_call_operand.vmem [shape: f32[1,64], index: 2, kind: input, shape index: {}]
  %s3 = inlined_call_operand.vmem [shape: bf16[2,256,64], index: 3, kind: output, shape index: {}]
  %s4 = sld [smem:[#allocation0]]
  $region45: #{tpu_custom_call.1} parent=0
    _
  %s6 = ssub.s32 1, %s4
  %s7 = scalar_select 0, %s6, %s4
  loop: start=0, step=1, limit=4
  $region2: #{tpu_custom_call.1} parent=0 // loop_pre_header
    _
  $region3: #{tpu_custom_call.1} parent=0 // loop_header
    %s9 = sphi 0, %s13
    %p10 = scmp.ge.s32.totalorder %s9, 4
    %s16 = sphi 0, %s28
    %s17 = sphi 0, %s24
    %s18 = sphi 0, %s16
    %s19 = sphi 0, %s17
    %s20 = sphi 0, %s18
    %s21 = sphi 0, %s19
    %s33 = sphi 0, %s35
    %s36 = sphi 0, %s33
    %s37 = sphi 0, %s36
    %s53 = sphi 0, %s37
    %s57 = sphi 0, %s57
    %s59 = sphi 0, %s57
    %s60 = sphi 0, %s59
    %s74 = sphi 0, %s60
    %s78 = sphi 0, %s78
    %s80 = sphi 0, %s78
    %s81 = sphi 0, %s80
    %s95 = sphi 0, %s81
    %s103 = sphi 0, %s105
    %s106 = sphi 0, %s103
    %s107 = sphi 0, %s106
    %s123 = sphi 0, %s107
  $region4: #{tpu_custom_call.1} parent=0 // loop_header_branch
    %12 = sbr.rel (%p10) target = $region8
  $region5: #{tpu_custom_call.1} parent=0 // loop_body
    %s14 = ssub.s32 %s9, 1
    %s15 = ssub.s32 %s9, 2
    %s22 = sadd.s32 1, %s17
    %p23 = scmp.ge.s32.totalorder %s22, 1
    %s24 = scalar_select %p23, 0, %s22
    %s25 = sadd.s32 1, %s16
    %s26 = scalar_select %p23, %s25, %s16
    %p27 = scmp.ge.s32.totalorder %s26, 2
    %s28 = scalar_select %p27, 0, %s26
    %s29 = ssub.s32 %s16, %s28
    %s30 = ssub.s32 %s17, %s24
    %s31 = sor.u32 %s29, %s30
    %p32 = scmp.eq.s32.totalorder %s31, 0
    %s34 = sadd.s32 %s33, 1
    %s35 = scalar_select %p32, %s33, %s34
    %p38 = pneg %p32
    %p39 = scmp.eq.s32.totalorder %s9, 1
    %p40 = por %p38, %p39
    %p41 = scmp.ne.s32.totalorder %s33, %s36
    %p42 = scmp.eq.s32.totalorder %s9, 0
    %p43 = por %p41, %p42
    %p44 = scmp.ne.s32.totalorder %s33, %s36
    %p45 = scmp.eq.s32.totalorder %s14, 1
    %p46 = por %p44, %p45
    %p47 = scmp.ne.s32.totalorder %s36, %s37
    %p48 = scmp.eq.s32.totalorder %s14, 0
    %p49 = por %p47, %p48
    %p50 = scmp.ne.s32.totalorder %s36, %s37
    %p51 = scmp.eq.s32.totalorder %s15, 1
    %p52 = por %p50, %p51
    %p54 = scmp.ne.s32.totalorder %s37, %s53
    %p55 = scmp.eq.s32.totalorder %s15, 0
    %p56 = por %p54, %p55
    %s58 = sadd.s32 %s57, 1
    %p61 = scmp.eq.s32.totalorder %s9, 1
    %p62 = scmp.ne.s32.totalorder %s57, %s59
    %p63 = scmp.eq.s32.totalorder %s9, 0
    %p64 = por %p62, %p63
    %p65 = scmp.ne.s32.totalorder %s57, %s59
    %p66 = scmp.eq.s32.totalorder %s14, 1
    %p67 = por %p65, %p66
    %p68 = scmp.ne.s32.totalorder %s59, %s60
    %p69 = scmp.eq.s32.totalorder %s14, 0
    %p70 = por %p68, %p69
    %p71 = scmp.ne.s32.totalorder %s59, %s60
    %p72 = scmp.eq.s32.totalorder %s15, 1
    %p73 = por %p71, %p72
    %p75 = scmp.ne.s32.totalorder %s60, %s74
    %p76 = scmp.eq.s32.totalorder %s15, 0
    %p77 = por %p75, %p76
    %s79 = sadd.s32 %s78, 1
    %p82 = scmp.eq.s32.totalorder %s9, 1
    %p83 = scmp.ne.s32.totalorder %s78, %s80
    %p84 = scmp.eq.s32.totalorder %s9, 0
    %p85 = por %p83, %p84
    %p86 = scmp.ne.s32.totalorder %s78, %s80
    %p87 = scmp.eq.s32.totalorder %s14, 1
    %p88 = por %p86, %p87
    %p89 = scmp.ne.s32.totalorder %s80, %s81
    %p90 = scmp.eq.s32.totalorder %s14, 0
    %p91 = por %p89, %p90
    %p92 = scmp.ne.s32.totalorder %s80, %s81
    %p93 = scmp.eq.s32.totalorder %s15, 1
    %p94 = por %p92, %p93
    %p96 = scmp.ne.s32.totalorder %s81, %s95
    %p97 = scmp.eq.s32.totalorder %s15, 0
    %p98 = por %p96, %p97
    %s99 = ssub.s32 %s16, %s28
    %s100 = ssub.s32 %s17, %s24
    %s101 = sor.u32 %s99, %s100
    %p102 = scmp.eq.s32.totalorder %s101, 0
    %s104 = sadd.s32 %s103, 1
    %s105 = scalar_select %p102, %s103, %s104
    %p108 = pneg %p102
    %p109 = scmp.eq.s32.totalorder %s9, 1
    %p110 = por %p108, %p109
    %p111 = scmp.ne.s32.totalorder %s103, %s106
    %p112 = scmp.eq.s32.totalorder %s9, 0
    %p113 = por %p111, %p112
    %p114 = scmp.ne.s32.totalorder %s103, %s106
    %p115 = scmp.eq.s32.totalorder %s14, 1
    %p116 = por %p114, %p115
    %p117 = scmp.ne.s32.totalorder %s106, %s107
    %p118 = scmp.eq.s32.totalorder %s14, 0
    %p119 = por %p117, %p118
    %p120 = scmp.ne.s32.totalorder %s106, %s107
    %p121 = scmp.eq.s32.totalorder %s15, 1
    %p122 = por %p120, %p121
    %p124 = scmp.ne.s32.totalorder %s107, %s123
    %p125 = scmp.eq.s32.totalorder %s15, 0
    %p126 = por %p124, %p125
    %p127 = scmp.le.s32.totalorder 1, %s9
    %p128 = scmp.lt.s32.totalorder %s9, 3
    %p129 = pnand %p127, %p128
    %p130 = pneg %p129
    // Predicated region
    $region9: #{tpu_custom_call.1} parent=5 // pred_check
      _
    $region10: #{tpu_custom_call.1} parent=5 // pred_check_branch
      %132 = sbr.rel (%p129) target = $region12
    $region11: #{tpu_custom_call.1} parent=5 // pred_region
      %s133 = ssub.s32 %s9, 1
      // Predicated region
      $region13: #{tpu_custom_call.1} parent=11 // pred_check
        %p134 = pneg %p70
      $region14: #{tpu_custom_call.1} parent=11 // pred_check_branch
        %136 = sbr.rel (%p134) target = $region16
      $region15: #{tpu_custom_call.1} parent=11 // pred_region
        _
      $region16: #{tpu_custom_call.1} parent=11 // pred_fallthru
        _
      // Predicated region
      $region17: #{tpu_custom_call.1} parent=11 // pred_check
        %p137 = pneg %p91
      $region18: #{tpu_custom_call.1} parent=11 // pred_check_branch
        %139 = sbr.rel (%p137) target = $region20
      $region19: #{tpu_custom_call.1} parent=11 // pred_region
        _
      $region20: #{tpu_custom_call.1} parent=11 // pred_fallthru
        _
    $region12: #{tpu_custom_call.1} parent=5 // pred_fallthru
      _
    %p140 = scmp.lt.s32.totalorder %s9, 2
    // Predicated region
    $region21: #{tpu_custom_call.1} parent=5 // pred_check
      %p141 = pneg %p140
    $region22: #{tpu_custom_call.1} parent=5 // pred_check_branch
      %143 = sbr.rel (%p141) target = $region24
    $region23: #{tpu_custom_call.1} parent=5 // pred_region
      // Predicated region
      $region25: #{tpu_custom_call.1} parent=23 // pred_check
        %p144 = pneg %p43
      $region26: #{tpu_custom_call.1} parent=23 // pred_check_branch
        %146 = sbr.rel (%p144) target = $region28
      $region27: #{tpu_custom_call.1} parent=23 // pred_region
        %s147 = smul.u32 32, %s17
        %p148 = scmp.lt.s32.totalorder %s16, 1
        %s149 = scalar_select %p148, %s16, 1
        %p150 = scmp.lt.s32.totalorder %s147, 31
        %s151 = scalar_select %p150, %s147, 31
        %s152 = smul.addr %s149, 32
        %s153 = sadd.s32 %s151, %s152
        %s154 = smul.addr %s153, 4
        %s155 = scalar_lea.vmem %s0, %s154
        %s156 = smul.u32 32, %s17
      $region28: #{tpu_custom_call.1} parent=23 // pred_fallthru
        _
    $region24: #{tpu_custom_call.1} parent=5 // pred_fallthru
      _
    %p157 = scmp.le.s32.totalorder 1, %s9
    %p158 = scmp.lt.s32.totalorder %s9, 3
    %p159 = pnand %p157, %p158
    %p160 = pneg %p159
    // Predicated region
    $region29: #{tpu_custom_call.1} parent=5 // pred_check
      _
    $region30: #{tpu_custom_call.1} parent=5 // pred_check_branch
      %162 = sbr.rel (%p159) target = $region32
    $region31: #{tpu_custom_call.1} parent=5 // pred_region
      %s163 = ssub.s32 %s9, 1
      %s164 = smul.u32 32, %s19
      %p165 = scmp.lt.s32.totalorder %s18, 1
      %s166 = scalar_select %p165, %s18, 1
      %p167 = scmp.lt.s32.totalorder %s164, 31
      %s168 = scalar_select %p167, %s164, 31
      %s169 = smul.addr %s166, 32
      %s170 = sadd.s32 %s168, %s169
      %s171 = smul.addr %s170, 4
      %s172 = scalar_lea.vmem %s0, %s171
      %p173 = pneg %p49
      %p174 = pneg %p46
      %p175 = pneg %p70
      %p176 = pneg %p67
      %p177 = pneg %p91
      %p178 = pneg %p88
      %p179 = pneg %p119
      %p180 = pneg %p116
      %s181 = smul.u32 32, %s19
      %p182 = scmp.lt.s32.totalorder %s18, 1
      %s183 = scalar_select %p182, %s18, 1
      %p184 = scmp.lt.s32.totalorder %s181, 31
      %s185 = scalar_select %p184, %s181, 31
      %s186 = smul.addr %s183, 32
      %s187 = sadd.s32 %s185, %s186
      %s188 = smul.addr %s187, 4
      %s189 = scalar_lea.vmem %s3, %s188
      %s190 = smul.u32 32, %s19
      %p191 = scmp.lt.s32.totalorder %s18, 1
      %s192 = scalar_select %p191, %s18, 1
      %p193 = scmp.lt.s32.totalorder %s190, 31
      %s194 = scalar_select %p193, %s190, 31
      %s195 = smul.addr %s192, 32
      %s196 = sadd.s32 %s194, %s195
      %s197 = smul.addr %s196, 4
      %s198 = scalar_lea.vmem %s0, %s197
      %s199 = smul.u32 32, %s19
      %s200 = smul.u32 32, %s19
      %p201 = scmp.lt.s32.totalorder %s18, 1
      %s202 = scalar_select %p201, %s18, 1
      %p203 = scmp.lt.s32.totalorder %s200, 31
      %s204 = scalar_select %p203, %s200, 31
      %s205 = smul.addr %s202, 32
      %s206 = sadd.s32 %s204, %s205
      %s207 = smul.addr %s206, 4
      %s208 = scalar_lea.vmem %s3, %s207
      %s209 = smul.u32 32, %s19
      %v211 = vld [vmem:[%s198] sm:$0xf]
      %v212 = vld [vmem:[%s198 + $0x4] sm:$0xf]
      %v213 = vld [vmem:[%s198 + $0x8] sm:$0xf]
      %v214 = vld [vmem:[%s198 + $0xc] sm:$0xf]
      %v215 = vld [vmem:[%s198 + $0x10] sm:$0xf]
      %v216 = vld [vmem:[%s198 + $0x14] sm:$0xf]
      %v217 = vld [vmem:[%s198 + $0x18] sm:$0xf]
      %v218 = vld [vmem:[%s198 + $0x1c] sm:$0xf]
      %v219 = vld [vmem:[%s198 + $0x20] sm:$0xf]
      %v220 = vld [vmem:[%s198 + $0x24] sm:$0xf]
      %v221 = vld [vmem:[%s198 + $0x28] sm:$0xf]
      %v222 = vld [vmem:[%s198 + $0x2c] sm:$0xf]
      %v223 = vld [vmem:[%s198 + $0x30] sm:$0xf]
      %v224 = vld [vmem:[%s198 + $0x34] sm:$0xf]
      %v225 = vld [vmem:[%s198 + $0x38] sm:$0xf]
      %v226 = vld [vmem:[%s198 + $0x3c] sm:$0xf]
      %v227 = vld [vmem:[%s198 + $0x40] sm:$0xf]
      %v228 = vld [vmem:[%s198 + $0x44] sm:$0xf]
      %v229 = vld [vmem:[%s198 + $0x48] sm:$0xf]
      %v230 = vld [vmem:[%s198 + $0x4c] sm:$0xf]
      %v231 = vld [vmem:[%s198 + $0x50] sm:$0xf]
      %v232 = vld [vmem:[%s198 + $0x54] sm:$0xf]
      %v233 = vld [vmem:[%s198 + $0x58] sm:$0xf]
      %v234 = vld [vmem:[%s198 + $0x5c] sm:$0xf]
      %v235 = vld [vmem:[%s198 + $0x60] sm:$0xf]
      %v236 = vld [vmem:[%s198 + $0x64] sm:$0xf]
      %v237 = vld [vmem:[%s198 + $0x68] sm:$0xf]
      %v238 = vld [vmem:[%s198 + $0x6c] sm:$0xf]
      %v239 = vld [vmem:[%s198 + $0x70] sm:$0xf]
      %v240 = vld [vmem:[%s198 + $0x74] sm:$0xf]
      %v241 = vld [vmem:[%s198 + $0x78] sm:$0xf]
      %v242 = vld [vmem:[%s198 + $0x7c] sm:$0xf]
      %v243 = vld [vmem:[%s1] sm:$0xf]
      %v244 = vld [vmem:[%s1 + $0x4] sm:$0x1]
      %v245 = vld [vmem:[%s2] sm:$0x1]
      %v247 = vperm.slane %v245, 0
      %v281 = vunpack.c.l.b16 %v211
      %v282 = vunpack.c.l.b16 %v212
      %v283 = vunpack.c.l.b16 %v213
      %v284 = vunpack.c.l.b16 %v214
      %v285 = vunpack.c.l.b16 %v215
      %v286 = vunpack.c.l.b16 %v216
      %v287 = vunpack.c.l.b16 %v217
      %v288 = vunpack.c.l.b16 %v218
      %v289 = vunpack.c.l.b16 %v219
      %v290 = vunpack.c.l.b16 %v220
      %v291 = vunpack.c.l.b16 %v221
      %v292 = vunpack.c.l.b16 %v222
      %v293 = vunpack.c.l.b16 %v223
      %v294 = vunpack.c.l.b16 %v224
      %v295 = vunpack.c.l.b16 %v225
      %v296 = vunpack.c.l.b16 %v226
      %v297 = vunpack.c.l.b16 %v227
      %v298 = vunpack.c.l.b16 %v228
      %v299 = vunpack.c.l.b16 %v229
      %v300 = vunpack.c.l.b16 %v230
      %v301 = vunpack.c.l.b16 %v231
      %v302 = vunpack.c.l.b16 %v232
      %v303 = vunpack.c.l.b16 %v233
      %v304 = vunpack.c.l.b16 %v234
      %v305 = vunpack.c.l.b16 %v235
      %v306 = vunpack.c.l.b16 %v236
      %v307 = vunpack.c.l.b16 %v237
      %v308 = vunpack.c.l.b16 %v238
      %v309 = vunpack.c.l.b16 %v239
      %v310 = vunpack.c.l.b16 %v240
      %v311 = vunpack.c.l.b16 %v241
      %v312 = vunpack.c.l.b16 %v242
      %v313 = vpack.c.b16 %v282, %v281
      %v314 = vpack.c.b16 %v284, %v283
      %v315 = vpack.c.b16 %v286, %v285
      %v316 = vpack.c.b16 %v288, %v287
      %v317 = vpack.c.b16 %v290, %v289
      %v318 = vpack.c.b16 %v292, %v291
      %v319 = vpack.c.b16 %v294, %v293
      %v320 = vpack.c.b16 %v296, %v295
      %v321 = vpack.c.b16 %v298, %v297
      %v322 = vpack.c.b16 %v300, %v299
      %v323 = vpack.c.b16 %v302, %v301
      %v324 = vpack.c.b16 %v304, %v303
      %v325 = vpack.c.b16 %v306, %v305
      %v326 = vpack.c.b16 %v308, %v307
      %v327 = vpack.c.b16 %v310, %v309
      %v328 = vpack.c.b16 %v312, %v311
      %v331 = vunpack.c.l.b16 %v243
      %v332 = vunpack.c.l.b16 %v244
      %v333 = vpack.c.b16 %v332, %v331
      %vm334 = vcmask 72704
      %v336 = vsel %vm334, %v313, 0
      %v339 = vsel %vm334, %v314, 0
      %v342 = vsel %vm334, %v315, 0
      %v345 = vsel %vm334, %v316, 0
      %v348 = vsel %vm334, %v317, 0
      %v351 = vsel %vm334, %v318, 0
      %v354 = vsel %vm334, %v319, 0
      %v357 = vsel %vm334, %v320, 0
      %v360 = vsel %vm334, %v321, 0
      %v363 = vsel %vm334, %v322, 0
      %v366 = vsel %vm334, %v323, 0
      %v369 = vsel %vm334, %v324, 0
      %v372 = vsel %vm334, %v325, 0
      %v375 = vsel %vm334, %v326, 0
      %v378 = vsel %vm334, %v327, 0
      %v381 = vsel %vm334, %v328, 0
      %vm383 = vcmask 1043456
      %vm384 = vcmask 1044480
      %v385 = vsel %vm383, 4294967295, 65535
      %v386 = vsel %vm384, %v385, 0
      %v388 = vand.u32 %v333, %v386
      %390 = vmatpush.bf16.msra.mxu0 0
      %391 = vmatpush.bf16.msra.mxu0 0
      %392 = vmatpush.bf16.msra.mxu0 0
      %393 = vmatpush.bf16.msra.mxu0 0
      %394 = vmatpush.bf16.msra.mxu0 0
      %395 = vmatpush.bf16.msra.mxu0 0
      %396 = vmatpush.bf16.msra.mxu0 0
      %397 = vmatpush.bf16.msra.mxu0 %v388
      %398 = vmatmul.bf16.gmra.mxu0 %v336
      %v399 = vpop.f32.mrf.mxu0
      %v400 = vadd.f32 %v247, %v399
      %v401 = vpop.f32.mrf.mxu0
      %v402 = vadd.f32 %v247, %v401
      %403 = vmatmul.bf16.gmra.mxu0 %v339
      %v404 = vpop.f32.mrf.mxu0
      %v405 = vadd.f32 %v247, %v404
      %v406 = vpop.f32.mrf.mxu0
      %v407 = vadd.f32 %v247, %v406
      %408 = vmatmul.bf16.gmra.mxu0 %v342
      %v409 = vpop.f32.mrf.mxu0
      %v410 = vadd.f32 %v247, %v409
      %v411 = vpop.f32.mrf.mxu0
      %v412 = vadd.f32 %v247, %v411
      %413 = vmatmul.bf16.gmra.mxu0 %v345
      %v414 = vpop.f32.mrf.mxu0
      %v415 = vadd.f32 %v247, %v414
      %v416 = vpop.f32.mrf.mxu0
      %v417 = vadd.f32 %v247, %v416
      %418 = vmatmul.bf16.gmra.mxu0 %v348
      %v419 = vpop.f32.mrf.mxu0
      %v420 = vadd.f32 %v247, %v419
      %v421 = vpop.f32.mrf.mxu0
      %v422 = vadd.f32 %v247, %v421
      %423 = vmatmul.bf16.gmra.mxu0 %v351
      %v424 = vpop.f32.mrf.mxu0
      %v425 = vadd.f32 %v247, %v424
      %v426 = vpop.f32.mrf.mxu0
      %v427 = vadd.f32 %v247, %v426
      %428 = vmatmul.bf16.gmra.mxu0 %v354
      %v429 = vpop.f32.mrf.mxu0
      %v430 = vadd.f32 %v247, %v429
      %v431 = vpop.f32.mrf.mxu0
      %v432 = vadd.f32 %v247, %v431
      %433 = vmatmul.bf16.gmra.mxu0 %v357
      %v434 = vpop.f32.mrf.mxu0
      %v435 = vadd.f32 %v247, %v434
      %v436 = vpop.f32.mrf.mxu0
      %v437 = vadd.f32 %v247, %v436
      %438 = vmatmul.bf16.gmra.mxu0 %v360
      %v439 = vpop.f32.mrf.mxu0
      %v440 = vadd.f32 %v247, %v439
      %v441 = vpop.f32.mrf.mxu0
      %v442 = vadd.f32 %v247, %v441
      %443 = vmatmul.bf16.gmra.mxu0 %v363
      %v444 = vpop.f32.mrf.mxu0
      %v445 = vadd.f32 %v247, %v444
      %v446 = vpop.f32.mrf.mxu0
      %v447 = vadd.f32 %v247, %v446
      %448 = vmatmul.bf16.gmra.mxu0 %v366
      %v449 = vpop.f32.mrf.mxu0
      %v450 = vadd.f32 %v247, %v449
      %v451 = vpop.f32.mrf.mxu0
      %v452 = vadd.f32 %v247, %v451
      %453 = vmatmul.bf16.gmra.mxu0 %v369
      %v454 = vpop.f32.mrf.mxu0
      %v455 = vadd.f32 %v247, %v454
      %v456 = vpop.f32.mrf.mxu0
      %v457 = vadd.f32 %v247, %v456
      %458 = vmatmul.bf16.gmra.mxu0 %v372
      %v459 = vpop.f32.mrf.mxu0
      %v460 = vadd.f32 %v247, %v459
      %v461 = vpop.f32.mrf.mxu0
      %v462 = vadd.f32 %v247, %v461
      %463 = vmatmul.bf16.gmra.mxu0 %v375
      %v464 = vpop.f32.mrf.mxu0
      %v465 = vadd.f32 %v247, %v464
      %v466 = vpop.f32.mrf.mxu0
      %v467 = vadd.f32 %v247, %v466
      %468 = vmatmul.bf16.gmra.mxu0 %v378
      %v469 = vpop.f32.mrf.mxu0
      %v470 = vadd.f32 %v247, %v469
      %v471 = vpop.f32.mrf.mxu0
      %v472 = vadd.f32 %v247, %v471
      %473 = vmatmul.bf16.gmra.mxu0 %v381
      %v474 = vpop.f32.mrf.mxu0
      %v475 = vadd.f32 %v247, %v474
      %v476 = vpop.f32.mrf.mxu0
      %v477 = vadd.f32 %v247, %v476
      %478 = vdwg.mxu0
      %v479 = vmax.f32 %v400, 0.0
      %v480 = vmax.f32 %v402, 0.0
      %v481 = vmax.f32 %v405, 0.0
      %v482 = vmax.f32 %v407, 0.0
      %v483 = vmax.f32 %v410, 0.0
      %v484 = vmax.f32 %v412, 0.0
      %v485 = vmax.f32 %v415, 0.0
      %v486 = vmax.f32 %v417, 0.0
      %v487 = vmax.f32 %v420, 0.0
      %v488 = vmax.f32 %v422, 0.0
      %v489 = vmax.f32 %v425, 0.0
      %v490 = vmax.f32 %v427, 0.0
      %v491 = vmax.f32 %v430, 0.0
      %v492 = vmax.f32 %v432, 0.0
      %v493 = vmax.f32 %v435, 0.0
      %v494 = vmax.f32 %v437, 0.0
      %v495 = vmax.f32 %v440, 0.0
      %v496 = vmax.f32 %v442, 0.0
      %v497 = vmax.f32 %v445, 0.0
      %v498 = vmax.f32 %v447, 0.0
      %v499 = vmax.f32 %v450, 0.0
      %v500 = vmax.f32 %v452, 0.0
      %v501 = vmax.f32 %v455, 0.0
      %v502 = vmax.f32 %v457, 0.0
      %v503 = vmax.f32 %v460, 0.0
      %v504 = vmax.f32 %v462, 0.0
      %v505 = vmax.f32 %v465, 0.0
      %v506 = vmax.f32 %v467, 0.0
      %v507 = vmax.f32 %v470, 0.0
      %v508 = vmax.f32 %v472, 0.0
      %v509 = vmax.f32 %v475, 0.0
      %v510 = vmax.f32 %v477, 0.0
      %v511 = vpack.c.bf16 %v479, %v479
      %v512 = vpack.c.bf16 %v480, %v480
      %v513 = vpack.c.bf16 %v481, %v481
      %v514 = vpack.c.bf16 %v482, %v482
      %v515 = vpack.c.bf16 %v483, %v483
      %v516 = vpack.c.bf16 %v484, %v484
      %v517 = vpack.c.bf16 %v485, %v485
      %v518 = vpack.c.bf16 %v486, %v486
      %v519 = vpack.c.bf16 %v487, %v487
      %v520 = vpack.c.bf16 %v488, %v488
      %v521 = vpack.c.bf16 %v489, %v489
      %v522 = vpack.c.bf16 %v490, %v490
      %v523 = vpack.c.bf16 %v491, %v491
      %v524 = vpack.c.bf16 %v492, %v492
      %v525 = vpack.c.bf16 %v493, %v493
      %v526 = vpack.c.bf16 %v494, %v494
      %v527 = vpack.c.bf16 %v495, %v495
      %v528 = vpack.c.bf16 %v496, %v496
      %v529 = vpack.c.bf16 %v497, %v497
      %v530 = vpack.c.bf16 %v498, %v498
      %v531 = vpack.c.bf16 %v499, %v499
      %v532 = vpack.c.bf16 %v500, %v500
      %v533 = vpack.c.bf16 %v501, %v501
      %v534 = vpack.c.bf16 %v502, %v502
      %v535 = vpack.c.bf16 %v503, %v503
      %v536 = vpack.c.bf16 %v504, %v504
      %v537 = vpack.c.bf16 %v505, %v505
      %v538 = vpack.c.bf16 %v506, %v506
      %v539 = vpack.c.bf16 %v507, %v507
      %v540 = vpack.c.bf16 %v508, %v508
      %v541 = vpack.c.bf16 %v509, %v509
      %v542 = vpack.c.bf16 %v510, %v510
      %vm543 = vcmask 519168
      %544 = vst.msk [vmem:[%s208] sm:$0xf] %vm543, %v511
      %545 = vst.msk [vmem:[%s208 + $0x4] sm:$0xf] %vm543, %v512
      %546 = vst.msk [vmem:[%s208 + $0x8] sm:$0xf] %vm543, %v513
      %547 = vst.msk [vmem:[%s208 + $0xc] sm:$0xf] %vm543, %v514
      %548 = vst.msk [vmem:[%s208 + $0x10] sm:$0xf] %vm543, %v515
      %549 = vst.msk [vmem:[%s208 + $0x14] sm:$0xf] %vm543, %v516
      %550 = vst.msk [vmem:[%s208 + $0x18] sm:$0xf] %vm543, %v517
      %551 = vst.msk [vmem:[%s208 + $0x1c] sm:$0xf] %vm543, %v518
      %552 = vst.msk [vmem:[%s208 + $0x20] sm:$0xf] %vm543, %v519
      %553 = vst.msk [vmem:[%s208 + $0x24] sm:$0xf] %vm543, %v520
      %554 = vst.msk [vmem:[%s208 + $0x28] sm:$0xf] %vm543, %v521
      %555 = vst.msk [vmem:[%s208 + $0x2c] sm:$0xf] %vm543, %v522
      %556 = vst.msk [vmem:[%s208 + $0x30] sm:$0xf] %vm543, %v523
      %557 = vst.msk [vmem:[%s208 + $0x34] sm:$0xf] %vm543, %v524
      %558 = vst.msk [vmem:[%s208 + $0x38] sm:$0xf] %vm543, %v525
      %559 = vst.msk [vmem:[%s208 + $0x3c] sm:$0xf] %vm543, %v526
      %560 = vst.msk [vmem:[%s208 + $0x40] sm:$0xf] %vm543, %v527
      %561 = vst.msk [vmem:[%s208 + $0x44] sm:$0xf] %vm543, %v528
      %562 = vst.msk [vmem:[%s208 + $0x48] sm:$0xf] %vm543, %v529
      %563 = vst.msk [vmem:[%s208 + $0x4c] sm:$0xf] %vm543, %v530
      %564 = vst.msk [vmem:[%s208 + $0x50] sm:$0xf] %vm543, %v531
      %565 = vst.msk [vmem:[%s208 + $0x54] sm:$0xf] %vm543, %v532
      %566 = vst.msk [vmem:[%s208 + $0x58] sm:$0xf] %vm543, %v533
      %567 = vst.msk [vmem:[%s208 + $0x5c] sm:$0xf] %vm543, %v534
      %568 = vst.msk [vmem:[%s208 + $0x60] sm:$0xf] %vm543, %v535
      %569 = vst.msk [vmem:[%s208 + $0x64] sm:$0xf] %vm543, %v536
      %570 = vst.msk [vmem:[%s208 + $0x68] sm:$0xf] %vm543, %v537
      %571 = vst.msk [vmem:[%s208 + $0x6c] sm:$0xf] %vm543, %v538
      %572 = vst.msk [vmem:[%s208 + $0x70] sm:$0xf] %vm543, %v539
      %573 = vst.msk [vmem:[%s208 + $0x74] sm:$0xf] %vm543, %v540
      %574 = vst.msk [vmem:[%s208 + $0x78] sm:$0xf] %vm543, %v541
      %575 = vst.msk [vmem:[%s208 + $0x7c] sm:$0xf] %vm543, %v542
      %s576 = smul.u32 32, %s19
      %p577 = scmp.lt.s32.totalorder %s18, 1
      %s578 = scalar_select %p577, %s18, 1
      %p579 = scmp.lt.s32.totalorder %s576, 31
      %s580 = scalar_select %p579, %s576, 31
      %s581 = smul.addr %s578, 32
      %s582 = sadd.s32 %s580, %s581
      %s583 = smul.addr %s582, 4
      %s584 = scalar_lea.vmem %s3, %s583
      // Predicated region
      $region33: #{tpu_custom_call.1} parent=31 // pred_check
        %p585 = pneg %p116
      $region34: #{tpu_custom_call.1} parent=31 // pred_check_branch
        %587 = sbr.rel (%p585) target = $region36
      $region35: #{tpu_custom_call.1} parent=31 // pred_region
        %s588 = smul.u32 32, %s19
      $region36: #{tpu_custom_call.1} parent=31 // pred_fallthru
        _
    $region32: #{tpu_custom_call.1} parent=5 // pred_fallthru
      _
    %p589 = scmp.le.s32.totalorder 2, %s9
    // Predicated region
    $region37: #{tpu_custom_call.1} parent=5 // pred_check
      %p590 = pneg %p589
    $region38: #{tpu_custom_call.1} parent=5 // pred_check_branch
      %592 = sbr.rel (%p590) target = $region40
    $region39: #{tpu_custom_call.1} parent=5 // pred_region
      %s593 = ssub.s32 %s9, 2
      // Predicated region
      $region41: #{tpu_custom_call.1} parent=39 // pred_check
        %p594 = pneg %p122
      $region42: #{tpu_custom_call.1} parent=39 // pred_check_branch
        %596 = sbr.rel (%p594) target = $region44
      $region43: #{tpu_custom_call.1} parent=39 // pred_region
        %s597 = smul.u32 32, %s21
        %p598 = scmp.lt.s32.totalorder %s20, 1
        %s599 = scalar_select %p598, %s20, 1
        %p600 = scmp.lt.s32.totalorder %s597, 31
        %s601 = scalar_select %p600, %s597, 31
        %s602 = smul.addr %s599, 32
        %s603 = sadd.s32 %s601, %s602
        %s604 = smul.addr %s603, 4
        %s605 = scalar_lea.vmem %s3, %s604
      $region44: #{tpu_custom_call.1} parent=39 // pred_fallthru
        _
    $region40: #{tpu_custom_call.1} parent=5 // pred_fallthru
      _
  $region6: #{tpu_custom_call.1} parent=0 // loop_footer
    %s13 = sadd.s32 1, %s9
  $region7: #{tpu_custom_call.1} parent=0 // loop_footer_branch
    %8 = sbr.rel target = $region3
  $region8: #{tpu_custom_call.1} parent=0 // loop_exit
    _

</llo_original>
